<compile_context>
chip_gen: v7x
topology: tpu7x:2x2x1
jax: 0.10.0
libtpu: 0.0.40
codegen_flags: <defaults>
</compile_context>

<pallas_src>
import jax
import jax.numpy as jnp
from jax import lax
from jax.experimental import pallas as pl
from jax.experimental.pallas import tpu as pltpu


# ----------------------------------------------------------------------------
# Parameter packing (done ONCE, outside the per-call hot path)
# ----------------------------------------------------------------------------
def _param_offsets(F):
    """Sublane-aligned row offsets inside the packed parameter slab."""
    off_b = ((F + 7) // 8) * 8          # bias row starts on a multiple of 8 (24 for F=20)
    off_rw = off_b + 8                  # rand_weight starts on a multiple of 8 (32 for F=20)
    rows = ((off_rw + F + 7) // 8) * 8  # total slab rows, padded to a multiple of 8 (56)
    return off_b, off_rw, rows


def pack_fancy_mlp_params(linear_w, linear_b, rand_weight):
    """Build the aligned parameter slab [W^T | pad | b | pad | rand_weight | pad].

    Call this once when the weights are created/updated; pass the result to
    fancy_mlp / fancy_mlp_batched so no transpose/concat runs per forward call.
    """
    F = linear_w.shape[0]
    off_b, off_rw, rows = _param_offsets(F)
    params = jnp.zeros((rows, F), dtype=jnp.float32)
    params = params.at[0:F, :].set(linear_w.T.astype(jnp.float32))          # rows [0, F)
    params = params.at[off_b, :].set(linear_b.astype(jnp.float32))          # row  off_b
    params = params.at[off_rw:off_rw + F, :].set(rand_weight.astype(jnp.float32))  # rows [off_rw, off_rw+F)
    return params


# ----------------------------------------------------------------------------
# Kernel
# ----------------------------------------------------------------------------
def _fancy_mlp_compute(x, p):
    """Forward pass for one (B, F) instance; returns the scalar result."""
    F = x.shape[1]
    off_b, off_rw, _ = _param_offsets(F)

    wt = p[0:F, :]                      # (F, F)  == linear.weight.T   (aligned start 0)
    b = p[off_b:off_b + 1, :]           # (1, F)                        (aligned start 24)
    rw = p[off_rw:off_rw + F, :]        # (F, F)  rand_weight           (aligned start 32)

    # x = self.linear(x)
    h = jnp.dot(x, wt, preferred_element_type=jnp.float32) + b
    # x = relu(x @ rand_weight + 1)
    h = jnp.maximum(jnp.dot(h, rw, preferred_element_type=jnp.float32) + 1.0, 0.0)
    # x = self.linear(x)   (shared weights)
    h = jnp.dot(h, wt, preferred_element_type=jnp.float32) + b

    # h fits in a single (8,128) vreg (2 rows) -> plain reductions are cheapest.
    sum_h = jnp.sum(h)
    sum_sq = jnp.sum(h * h)
    norm0 = jnp.sqrt(sum_sq)            # Frobenius norm (torch default)

    # while x.norm() > 1: x /= 2   -> closed-form power-of-two scale.
    k = jnp.maximum(jnp.ceil(jnp.log2(norm0)), 0.0)
    scale = jnp.exp2(-k)
    # One-step fixups against log2/exp2 rounding at the strict `> 1` boundary.
    scale = jnp.where(norm0 * scale > 1.0, scale * 0.5, scale)
    scale = jnp.where(jnp.logical_and(scale < 1.0, norm0 * (scale * 2.0) <= 1.0),
                      scale * 2.0, scale)
    # if x.norm() < 0.8: x *= 10
    scale = jnp.where(norm0 * scale < 0.8, scale * 10.0, scale)

    # return x.sum()  — the power-of-two scale folds in exactly (linear in h).
    return sum_h * scale


def fancy_mlp_kernel(x_ref, p_ref, out_ref):
    result = _fancy_mlp_compute(x_ref[...], p_ref[...])
    # Lane-dense (1, 128) write -> unmasked vst.
    out_ref[...] = jnp.full(out_ref.shape, result, dtype=out_ref.dtype)


# ----------------------------------------------------------------------------
# Wrappers
# ----------------------------------------------------------------------------
def fancy_mlp(x, params):
    """Single (B, F) instance."""
    out = pl.pallas_call(
        fancy_mlp_kernel,
        out_shape=jax.ShapeDtypeStruct((1, 128), jnp.float32),
        in_specs=[
            pl.BlockSpec(x.shape, lambda: (0, 0)),
            pl.BlockSpec(params.shape, lambda: (0, 0)),
        ],
        out_specs=pl.BlockSpec((1, 128), lambda: (0, 0)),
    )(x.astype(jnp.float32), params)
    return out[0, 0]


def fancy_mlp_batched(xs, params):
    """N independent (B, F) instances behind one pallas_call.

    grid=(N,) amortizes launch/DMA overhead; the weight slab is replicated
    (block index fixed) so it stays VMEM-resident across grid steps.  The
    "parallel" dimension semantics let v7x shard instances across both
    TensorCores (no-op on single-TC v5e/v6e).
    """
    N, B, F = xs.shape
    out = pl.pallas_call(
        fancy_mlp_kernel,
        out_shape=jax.ShapeDtypeStruct((N, 1, 128), jnp.float32),
        grid=(N,),
        in_specs=[
            pl.BlockSpec((None, B, F), lambda i: (i, 0, 0)),       # per-instance x
            pl.BlockSpec(params.shape, lambda i: (0, 0)),          # replicated weights
        ],
        out_specs=pl.BlockSpec((None, 1, 128), lambda i: (i, 0, 0)),
        compiler_params=pltpu.CompilerParams(
            dimension_semantics=("parallel",)),
    )(xs.astype(jnp.float32), params)
    return out[:, 0, 0]


# ----------------------------------------------------------------------------
# Pure-JAX reference (mirrors the PyTorch forward exactly)
# ----------------------------------------------------------------------------
def fancy_mlp_ref(x, linear_w, linear_b, rand_weight):
    h = x @ linear_w.T + linear_b
    h = jnp.maximum(h @ rand_weight + 1.0, 0.0)
    h = h @ linear_w.T + linear_b

    h = lax.while_loop(lambda a: jnp.linalg.norm(a) > 1.0,
                       lambda a: a / 2.0, h)
    h = lax.cond(jnp.linalg.norm(h) < 0.8, lambda a: a * 10.0, lambda a: a, h)
    return jnp.sum(h)


if __name__ == "__main__":
    key = jax.random.PRNGKey(0)
    k_x, k_rw, k_w, k_b, k_xs = jax.random.split(key, 5)

    B, F = 2, 20
    # Input (torch example uses torch.rand(2, 20)).
    x = jax.random.uniform(k_x, (B, F), dtype=jnp.float32)
    # self.rand_weight = torch.rand((20, 20))
    rand_weight = jax.random.uniform(k_rw, (F, F), dtype=jnp.float32)
    # nn.Linear(20, 20) default init: U(-1/sqrt(in), 1/sqrt(in))
    bound = 1.0 / (F ** 0.5)
    linear_w = jax.random.uniform(k_w, (F, F), dtype=jnp.float32,
                                  minval=-bound, maxval=bound)
    linear_b = jax.random.uniform(k_b, (F,), dtype=jnp.float32,
                                  minval=-bound, maxval=bound)

    # Pack the aligned parameter slab ONCE (hoisted out of the per-call path).
    params = jax.block_until_ready(pack_fancy_mlp_params(linear_w, linear_b, rand_weight))

    # --- single instance (matches the original module's forward) ---
    out = jax.block_until_ready(fancy_mlp(x, params))
    ref = fancy_mlp_ref(x, linear_w, linear_b, rand_weight)
    assert jnp.allclose(out, ref, rtol=1e-3, atol=1e-3), (out, ref)

    # --- batched: many independent (2, 20) inputs behind one pallas_call ---
    N = 8
    xs = jax.random.uniform(k_xs, (N, B, F), dtype=jnp.float32)
    outs = jax.block_until_ready(fancy_mlp_batched(xs, params))
    refs = jnp.stack([fancy_mlp_ref(xs[i], linear_w, linear_b, rand_weight)
                      for i in range(N)])
    assert jnp.allclose(outs, refs, rtol=1e-3, atol=1e-3), (outs, refs)

    print("KERNEL_OK")
</pallas_src>

<mosaic_0001>
module attributes {stable_mosaic.version = 11 : i64} {
  func.func @fancy_mlp_kernel(%arg0: memref<2x20xf32, #tpu.memory_space<vmem>>, %arg1: memref<56x20xf32, #tpu.memory_space<vmem>>, %arg2: memref<1x128xf32, #tpu.memory_space<vmem>>) attributes {dimension_semantics = [], scalar_prefetch = 0 : i64, scratch_operands = 0 : i64, tpu.core_type = #tpu.core_type<tc>} {
    %c0 = arith.constant 0 : index
    %c0_0 = arith.constant 0 : index
    %0 = vector.load %arg0[%c0, %c0_0] : memref<2x20xf32, #tpu.memory_space<vmem>>, vector<2x20xf32>
    %c0_1 = arith.constant 0 : index
    %c0_2 = arith.constant 0 : index
    %1 = vector.load %arg1[%c0_1, %c0_2] : memref<56x20xf32, #tpu.memory_space<vmem>>, vector<56x20xf32>
    %2 = vector.extract_strided_slice %1 {offsets = [0, 0], sizes = [20, 20], strides = [1, 1]} : vector<56x20xf32> to vector<20x20xf32>
    %3 = vector.extract_strided_slice %1 {offsets = [24, 0], sizes = [1, 20], strides = [1, 1]} : vector<56x20xf32> to vector<1x20xf32>
    %4 = vector.extract_strided_slice %1 {offsets = [32, 0], sizes = [20, 20], strides = [1, 1]} : vector<56x20xf32> to vector<20x20xf32>
    %cst = arith.constant dense<0.000000e+00> : vector<2x20xf32>
    %5 = tpu.matmul %0, %2, %cst {dimension_numbers = #tpu.dot_dimension_numbers<[1], [0], [0], [1], [0, 0, 1, 1], [], []>} : vector<2x20xf32>, vector<20x20xf32>, vector<2x20xf32> -> vector<2x20xf32>
    %6 = vector.broadcast %3 : vector<1x20xf32> to vector<2x20xf32>
    %7 = arith.addf %5, %6 : vector<2x20xf32>
    %cst_3 = arith.constant dense<0.000000e+00> : vector<2x20xf32>
    %8 = tpu.matmul %7, %4, %cst_3 {dimension_numbers = #tpu.dot_dimension_numbers<[1], [0], [0], [1], [0, 0, 1, 1], [], []>} : vector<2x20xf32>, vector<20x20xf32>, vector<2x20xf32> -> vector<2x20xf32>
    %cst_4 = arith.constant 1.000000e+00 : f32
    %9 = vector.broadcast %cst_4 : f32 to vector<2x20xf32>
    %10 = arith.addf %8, %9 : vector<2x20xf32>
    %cst_5 = arith.constant 0.000000e+00 : f32
    %11 = vector.broadcast %cst_5 : f32 to vector<2x20xf32>
    %12 = arith.maximumf %10, %11 : vector<2x20xf32>
    %cst_6 = arith.constant dense<0.000000e+00> : vector<2x20xf32>
    %13 = tpu.matmul %12, %2, %cst_6 {dimension_numbers = #tpu.dot_dimension_numbers<[1], [0], [0], [1], [0, 0, 1, 1], [], []>} : vector<2x20xf32>, vector<20x20xf32>, vector<2x20xf32> -> vector<2x20xf32>
    %14 = vector.broadcast %3 : vector<1x20xf32> to vector<2x20xf32>
    %15 = arith.addf %13, %14 : vector<2x20xf32>
    %16 = vector.shape_cast %15 : vector<2x20xf32> to vector<1x2x20xf32>
    %cst_7 = arith.constant dense<0.000000e+00> : vector<1xf32>
    %17 = vector.multi_reduction <add>, %16, %cst_7 [1, 2] : vector<1x2x20xf32> to vector<1xf32>
    %18 = vector.shape_cast %17 : vector<1xf32> to vector<1x1x1xf32>
    %19 = vector.extract %18[0, 0, 0] : f32 from vector<1x1x1xf32>
    %20 = arith.mulf %15, %15 : vector<2x20xf32>
    %21 = vector.shape_cast %20 : vector<2x20xf32> to vector<1x2x20xf32>
    %cst_8 = arith.constant dense<0.000000e+00> : vector<1xf32>
    %22 = vector.multi_reduction <add>, %21, %cst_8 [1, 2] : vector<1x2x20xf32> to vector<1xf32>
    %23 = vector.shape_cast %22 : vector<1xf32> to vector<1x1x1xf32>
    %24 = vector.extract %23[0, 0, 0] : f32 from vector<1x1x1xf32>
    %25 = math.sqrt %24 : f32
    %26 = math.log %25 : f32
    %cst_9 = arith.constant 2.000000e+00 : f32
    %27 = math.log %cst_9 : f32
    %28 = arith.divf %26, %27 : f32
    %29 = math.ceil %28 : f32
    %cst_10 = arith.constant 0.000000e+00 : f32
    %30 = arith.maximumf %29, %cst_10 : f32
    %cst_11 = arith.constant 0.000000e+00 : f32
    %31 = arith.subf %cst_11, %30 : f32
    %32 = math.exp2 %31 : f32
    %33 = arith.mulf %25, %32 : f32
    %cst_12 = arith.constant 1.000000e+00 : f32
    %34 = arith.cmpf ogt, %33, %cst_12 : f32
    %cst_13 = arith.constant 5.000000e-01 : f32
    %35 = arith.mulf %32, %cst_13 : f32
    %36 = arith.select %34, %35, %32 : f32
    %cst_14 = arith.constant 1.000000e+00 : f32
    %37 = arith.cmpf olt, %36, %cst_14 : f32
    %cst_15 = arith.constant 2.000000e+00 : f32
    %38 = arith.mulf %36, %cst_15 : f32
    %39 = arith.mulf %25, %38 : f32
    %cst_16 = arith.constant 1.000000e+00 : f32
    %40 = arith.cmpf ole, %39, %cst_16 : f32
    %41 = arith.andi %37, %40 : i1
    %cst_17 = arith.constant 2.000000e+00 : f32
    %42 = arith.mulf %36, %cst_17 : f32
    %43 = arith.select %41, %42, %36 : f32
    %44 = arith.mulf %25, %43 : f32
    %cst_18 = arith.constant 8.000000e-01 : f32
    %45 = arith.cmpf olt, %44, %cst_18 : f32
    %cst_19 = arith.constant 1.000000e+01 : f32
    %46 = arith.mulf %43, %cst_19 : f32
    %47 = arith.select %45, %46, %43 : f32
    %48 = arith.mulf %19, %47 : f32
    %49 = vector.broadcast %48 : f32 to vector<1x128xf32>
    %c0_20 = arith.constant 0 : index
    %c0_21 = arith.constant 0 : index
    %50 = vector.load %arg2[%c0_20, %c0_21] : memref<1x128xf32, #tpu.memory_space<vmem>>, vector<1x128xf32>
    tpu.vector_store %arg2[%c0_20, %c0_21], %49 {strides = array<i32>} : memref<1x128xf32, #tpu.memory_space<vmem>>, vector<1x128xf32>,
    return
  }
}

</mosaic_0001>

<llo_original>
// kernel: tpu_custom_call.1
$region0: #{tpu_custom_call.1}
  #allocation0 [shape = 'u32[]', space=smem, size = 0x4, offset = 0x4, fixed_abs, tag = 'smem constant byte address 0x4 - core index']
  #allocation1 [shape = 'u32[144,128]{1,0:T(1,128)}', space=vmem, size = 0x12000, scoped, tag = 'internal scratch']
  %s0 = inlined_call_operand.vmem [shape: f32[2,20], index: 0, kind: input, shape index: {}]
  %s1 = inlined_call_operand.vmem [shape: f32[56,20], index: 1, kind: input, shape index: {}]
  %s2 = inlined_call_operand.hbm [shape: f32[1,128], index: 2, kind: output, shape index: {}]
  %s3 = sld [smem:[#allocation0]]
  $region18: #{tpu_custom_call.1} parent=0
    _
  %s5 = ssub.s32 1, %s3
  %s6 = scalar_select 0, %s5, %s3
  $region1: #{tpu_custom_call.1} parent=0
    #allocation2 [shape = 'u8[512]{0}', space=vmem, size = 0x400, scoped, tag = 'output window, operand 0, single buffered']
    #allocation3 [shape = 's32[1]{0}', space=sflag, size = 0x4, scoped, tag = 'scoped memory for tpu_custom_call.1']
    %7 = vsyncpa [#allocation3], 0
    // Predicated region
    $region2: #{tpu_custom_call.1} parent=1 // pred_check
      _
    $region3: #{tpu_custom_call.1} parent=1 // pred_check_branch
      %9 = sbr.rel (0) target = $region5
    $region4: #{tpu_custom_call.1} parent=1 // pred_region
      _
    $region5: #{tpu_custom_call.1} parent=1 // pred_fallthru
      _
    // Predicated region
    $region6: #{tpu_custom_call.1} parent=1 // pred_check
      _
    $region7: #{tpu_custom_call.1} parent=1 // pred_check_branch
      %11 = sbr.rel (0) target = $region9
    $region8: #{tpu_custom_call.1} parent=1 // pred_region
      _
    $region9: #{tpu_custom_call.1} parent=1 // pred_fallthru
      _
    %v12 = vld [vmem:[%s0] sm:$0x3]
    %v13 = vld [vmem:[%s1] sm:$0xff]
    %v14 = vld [vmem:[%s1 + $0x8] sm:$0xff]
    %v15 = vld [vmem:[%s1 + $0x10] sm:$0xff]
    %v16 = vld [vmem:[%s1 + $0x18] sm:$0xff]
    %v17 = vld [vmem:[%s1 + $0x20] sm:$0xff]
    %v18 = vld [vmem:[%s1 + $0x28] sm:$0xff]
    %v19 = vld [vmem:[%s1 + $0x30] sm:$0xff]
    %v20 = vlaneseq
    %v21 = vshrl.u32 %v20, 7
    %v22 = vsub.s32 0, %v21
    %v23 = vrot.slane %v16, %v22
    %vm24 = vcmask 162816
    %v26 = vsel %vm24, %v12, 0
    %vm28 = vcmask 1043456
    %v30 = vsel %vm28, %v15, 0
    %32 = vmatprep.subr.mxu0 0.0
    %33 = vmatpush1.msra.mxu0 %v13
    %34 = vmatprep.subr.mxu0 0.0
    %35 = vmatpush1.msra.mxu0 %v14
    %36 = vmatprep.subr.mxu0 0.0
    %37 = vmatpush1.msra.mxu0 %v30
    %38 = vmatprep.subr.mxu0 0.0
    %39 = vmatpush1.msra.mxu0 0.0
    %40 = vmatprep.subr.mxu0 0.0
    %41 = vmatpush1.msra.mxu0 0.0
    %42 = vmatprep.subr.mxu0 0.0
    %43 = vmatpush1.msra.mxu0 0.0
    %44 = vmatprep.subr.mxu0 0.0
    %45 = vmatpush1.msra.mxu0 0.0
    %46 = vmatprep.subr.mxu0 0.0
    %47 = vmatpush1.msra.mxu0 0.0
    %48 = vmatprep.subr.mxu0 0.0
    %49 = vmatpush1.msra.mxu0 0.0
    %50 = vmatprep.subr.mxu0 0.0
    %51 = vmatpush1.msra.mxu0 0.0
    %52 = vmatprep.subr.mxu0 0.0
    %53 = vmatpush1.msra.mxu0 0.0
    %54 = vmatprep.subr.mxu0 0.0
    %55 = vmatpush1.msra.mxu0 0.0
    %56 = vmatprep.subr.mxu0 0.0
    %57 = vmatpush1.msra.mxu0 0.0
    %58 = vmatprep.subr.mxu0 0.0
    %59 = vmatpush1.msra.mxu0 0.0
    %60 = vmatprep.subr.mxu0 0.0
    %61 = vmatpush1.msra.mxu0 0.0
    %62 = vmatprep.subr.mxu0 0.0
    %63 = vmatpush1.msra.mxu0 0.0
    %64 = vmatprep.subr.mxu0 0.0
    %65 = vmatpush1.msra.mxu0 0.0
    %66 = vmatprep.subr.mxu0 0.0
    %67 = vmatpush1.msra.mxu0 0.0
    %68 = vmatprep.subr.mxu0 0.0
    %69 = vmatpush1.msra.mxu0 0.0
    %70 = vmatprep.subr.mxu0 0.0
    %71 = vmatpush1.msra.mxu0 0.0
    %72 = vmatprep.subr.mxu0 0.0
    %73 = vmatpush1.msra.mxu0 0.0
    %74 = vmatprep.subr.mxu0 0.0
    %75 = vmatpush1.msra.mxu0 0.0
    %76 = vmatprep.subr.mxu0 0.0
    %77 = vmatpush1.msra.mxu0 0.0
    %78 = vmatprep.subr.mxu0 0.0
    %79 = vmatpush1.msra.mxu0 0.0
    %80 = vmatprep.subr.mxu0 0.0
    %81 = vmatpush1.msra.mxu0 0.0
    %82 = vmatprep.subr.mxu0 0.0
    %83 = vmatpush1.msra.mxu0 0.0
    %84 = vmatprep.subr.mxu0 0.0
    %85 = vmatpush1.msra.mxu0 0.0
    %86 = vmatprep.subr.mxu0 0.0
    %87 = vmatpush1.msra.mxu0 0.0
    %88 = vmatprep.subr.mxu0 0.0
    %89 = vmatpush1.msra.mxu0 0.0
    %90 = vmatprep.subr.mxu0 0.0
    %91 = vmatpush1.msra.mxu0 0.0
    %92 = vmatprep.subr.mxu0 0.0
    %93 = vmatpush1.msra.mxu0 0.0
    %94 = vmatprep.subr.mxu0 0.0
    %95 = vmatpush1.msra.mxu0 0.0
    %96 = vmatprep.mubr.f32.mxu0 0.0
    %97 = vmatmul.mubr.f32.gmra.mrb[0].mxu0 %v26
    %v98 = vpop.f32.mrb[0].mxu0
    %v99 = vadd.f32 %v23, %v98
    %v100 = vpop.f32.mrb[0].mxu0
    %101 = vdwg.mxu0
    %v103 = vsel %vm24, %v99, 0
    %v106 = vsel %vm28, %v19, 0
    %108 = vmatprep.subr.mxu0 0.0
    %109 = vmatpush1.msra.mxu0 %v17
    %110 = vmatprep.subr.mxu0 0.0
    %111 = vmatpush1.msra.mxu0 %v18
    %112 = vmatprep.subr.mxu0 0.0
    %113 = vmatpush1.msra.mxu0 %v106
    %114 = vmatprep.subr.mxu0 0.0
    %115 = vmatpush1.msra.mxu0 0.0
    %116 = vmatprep.subr.mxu0 0.0
    %117 = vmatpush1.msra.mxu0 0.0
    %118 = vmatprep.subr.mxu0 0.0
    %119 = vmatpush1.msra.mxu0 0.0
    %120 = vmatprep.subr.mxu0 0.0
    %121 = vmatpush1.msra.mxu0 0.0
    %122 = vmatprep.subr.mxu0 0.0
    %123 = vmatpush1.msra.mxu0 0.0
    %124 = vmatprep.subr.mxu0 0.0
    %125 = vmatpush1.msra.mxu0 0.0
    %126 = vmatprep.subr.mxu0 0.0
    %127 = vmatpush1.msra.mxu0 0.0
    %128 = vmatprep.subr.mxu0 0.0
    %129 = vmatpush1.msra.mxu0 0.0
    %130 = vmatprep.subr.mxu0 0.0
    %131 = vmatpush1.msra.mxu0 0.0
    %132 = vmatprep.subr.mxu0 0.0
    %133 = vmatpush1.msra.mxu0 0.0
    %134 = vmatprep.subr.mxu0 0.0
    %135 = vmatpush1.msra.mxu0 0.0
    %136 = vmatprep.subr.mxu0 0.0
    %137 = vmatpush1.msra.mxu0 0.0
    %138 = vmatprep.subr.mxu0 0.0
    %139 = vmatpush1.msra.mxu0 0.0
    %140 = vmatprep.subr.mxu0 0.0
    %141 = vmatpush1.msra.mxu0 0.0
    %142 = vmatprep.subr.mxu0 0.0
    %143 = vmatpush1.msra.mxu0 0.0
    %144 = vmatprep.subr.mxu0 0.0
    %145 = vmatpush1.msra.mxu0 0.0
    %146 = vmatprep.subr.mxu0 0.0
    %147 = vmatpush1.msra.mxu0 0.0
    %148 = vmatprep.subr.mxu0 0.0
    %149 = vmatpush1.msra.mxu0 0.0
    %150 = vmatprep.subr.mxu0 0.0
    %151 = vmatpush1.msra.mxu0 0.0
    %152 = vmatprep.subr.mxu0 0.0
    %153 = vmatpush1.msra.mxu0 0.0
    %154 = vmatprep.subr.mxu0 0.0
    %155 = vmatpush1.msra.mxu0 0.0
    %156 = vmatprep.subr.mxu0 0.0
    %157 = vmatpush1.msra.mxu0 0.0
    %158 = vmatprep.subr.mxu0 0.0
    %159 = vmatpush1.msra.mxu0 0.0
    %160 = vmatprep.subr.mxu0 0.0
    %161 = vmatpush1.msra.mxu0 0.0
    %162 = vmatprep.subr.mxu0 0.0
    %163 = vmatpush1.msra.mxu0 0.0
    %164 = vmatprep.subr.mxu0 0.0
    %165 = vmatpush1.msra.mxu0 0.0
    %166 = vmatprep.subr.mxu0 0.0
    %167 = vmatpush1.msra.mxu0 0.0
    %168 = vmatprep.subr.mxu0 0.0
    %169 = vmatpush1.msra.mxu0 0.0
    %170 = vmatprep.subr.mxu0 0.0
    %171 = vmatpush1.msra.mxu0 0.0
    %172 = vmatprep.mubr.f32.mxu0 0.0
    %173 = vmatmul.mubr.f32.gmra.mrb[0].mxu0 %v103
    %v174 = vpop.f32.mrb[0].mxu0
    %v175 = vadd.f32 1.0, %v174
    %v176 = vpop.f32.mrb[0].mxu0
    %177 = vdwg.mxu0
    %v178 = vmax.f32 %v175, 0.0
    %v180 = vsel %vm24, %v178, 0
    %182 = vmatprep.subr.mxu0 0.0
    %183 = vmatpush1.msra.mxu0 %v13
    %184 = vmatprep.subr.mxu0 0.0
    %185 = vmatpush1.msra.mxu0 %v14
    %186 = vmatprep.subr.mxu0 0.0
    %187 = vmatpush1.msra.mxu0 %v30
    %188 = vmatprep.subr.mxu0 0.0
    %189 = vmatpush1.msra.mxu0 0.0
    %190 = vmatprep.subr.mxu0 0.0
    %191 = vmatpush1.msra.mxu0 0.0
    %192 = vmatprep.subr.mxu0 0.0
    %193 = vmatpush1.msra.mxu0 0.0
    %194 = vmatprep.subr.mxu0 0.0
    %195 = vmatpush1.msra.mxu0 0.0
    %196 = vmatprep.subr.mxu0 0.0
    %197 = vmatpush1.msra.mxu0 0.0
    %198 = vmatprep.subr.mxu0 0.0
    %199 = vmatpush1.msra.mxu0 0.0
    %200 = vmatprep.subr.mxu0 0.0
    %201 = vmatpush1.msra.mxu0 0.0
    %202 = vmatprep.subr.mxu0 0.0
    %203 = vmatpush1.msra.mxu0 0.0
    %204 = vmatprep.subr.mxu0 0.0
    %205 = vmatpush1.msra.mxu0 0.0
    %206 = vmatprep.subr.mxu0 0.0
    %207 = vmatpush1.msra.mxu0 0.0
    %208 = vmatprep.subr.mxu0 0.0
    %209 = vmatpush1.msra.mxu0 0.0
    %210 = vmatprep.subr.mxu0 0.0
    %211 = vmatpush1.msra.mxu0 0.0
    %212 = vmatprep.subr.mxu0 0.0
    %213 = vmatpush1.msra.mxu0 0.0
    %214 = vmatprep.subr.mxu0 0.0
    %215 = vmatpush1.msra.mxu0 0.0
    %216 = vmatprep.subr.mxu0 0.0
    %217 = vmatpush1.msra.mxu0 0.0
    %218 = vmatprep.subr.mxu0 0.0
    %219 = vmatpush1.msra.mxu0 0.0
    %220 = vmatprep.subr.mxu0 0.0
    %221 = vmatpush1.msra.mxu0 0.0
    %222 = vmatprep.subr.mxu0 0.0
    %223 = vmatpush1.msra.mxu0 0.0
    %224 = vmatprep.subr.mxu0 0.0
    %225 = vmatpush1.msra.mxu0 0.0
    %226 = vmatprep.subr.mxu0 0.0
    %227 = vmatpush1.msra.mxu0 0.0
    %228 = vmatprep.subr.mxu0 0.0
    %229 = vmatpush1.msra.mxu0 0.0
    %230 = vmatprep.subr.mxu0 0.0
    %231 = vmatpush1.msra.mxu0 0.0
    %232 = vmatprep.subr.mxu0 0.0
    %233 = vmatpush1.msra.mxu0 0.0
    %234 = vmatprep.subr.mxu0 0.0
    %235 = vmatpush1.msra.mxu0 0.0
    %236 = vmatprep.subr.mxu0 0.0
    %237 = vmatpush1.msra.mxu0 0.0
    %238 = vmatprep.subr.mxu0 0.0
    %239 = vmatpush1.msra.mxu0 0.0
    %240 = vmatprep.subr.mxu0 0.0
    %241 = vmatpush1.msra.mxu0 0.0
    %242 = vmatprep.subr.mxu0 0.0
    %243 = vmatpush1.msra.mxu0 0.0
    %244 = vmatprep.subr.mxu0 0.0
    %245 = vmatpush1.msra.mxu0 0.0
    %246 = vmatprep.mubr.f32.mxu0 0.0
    %247 = vmatmul.mubr.f32.gmra.mrb[0].mxu0 %v180
    %v248 = vpop.f32.mrb[0].mxu0
    %v249 = vadd.f32 %v23, %v248
    %v250 = vpop.f32.mrb[0].mxu0
    %251 = vdwg.mxu0
    %vm252 = vcmask 156672
    %v253 = vsel %vm252, %v249, 0.0
    %254 = vadd.xlane.f32.xlu0 %v253
    %v255 = vpop.xlane.xlu0 %254
    %v256 = vrot.slane %v255, 4
    %v257 = vadd.f32 %v255, %v256
    %v258 = vrot.slane %v257, 2
    %v259 = vadd.f32 %v257, %v258
    %v260 = vrot.slane %v259, 1
    %v261 = vadd.f32 %v259, %v260
    %s262 = vtos %v261
    %v263 = vmul.f32 %v249, %v249
    %v264 = vsel %vm252, %v263, 0.0
    %265 = vadd.xlane.f32.xlu0 %v264
    %v266 = vpop.xlane.xlu0 %265
    %v267 = vrot.slane %v266, 4
    %v268 = vadd.f32 %v266, %v267
    %v269 = vrot.slane %v268, 2
    %v270 = vadd.f32 %v268, %v269
    %v271 = vrot.slane %v270, 1
    %v272 = vadd.f32 %v270, %v271
    %s273 = vtos %v272
    %v274 = vstv %s273
    %v275 = vrsqrt.pop %v274
    %v276 = vmul.f32 %v274, %v275
    %vm277 = vcmp.eq.f32.partialorder %v274, inf
    %v278 = vsel %vm277, %v274, %v276
    %vm279 = vcmp.eq.f32.partialorder %v274, 0.0
    %v280 = vand.u32 %v274, 2147483648
    %v281 = vsel %vm279, %v280, %v278
    %s282 = vtos %v281
    %v283 = vstv %s282
    %v284 = vlog2.pop %v283
    %v285 = vmul.f32 %v284, 0.6931472
    %s286 = vtos %v285
    %v287 = vrcp.pop 0.6931472
    %s288 = vtos %v287
    %s289 = smul.f32 %s286, %s288
    %s290 = sceil.f32 %s289
    %s291 = smax.f32 %s290, 0.0
    %s292 = ssub.f32 0.0, %s291
    %v293 = vstv %s292
    %v294 = vpow.pop %v293
    %s295 = vtos %v294
    %s296 = smul.f32 %s282, %s295
    %p297 = scmp.gt.f32.partialorder %s296, 1.0
    %s298 = smul.f32 %s295, 0.5
    %s299 = scalar_select %p297, %s298, %s295
    %p300 = scmp.lt.f32.partialorder %s299, 1.0
    %s301 = smul.f32 %s299, 2.0
    %s302 = smul.f32 %s282, %s301
    %p303 = scmp.le.f32.partialorder %s302, 1.0
    %p304 = pnand %p300, %p303
    %p305 = pneg %p304
    %s306 = scalar_select %p305, %s301, %s299
    %s307 = smul.f32 %s282, %s306
    %p308 = scmp.lt.f32.partialorder %s307, 0.8
    %s309 = smul.f32 %s306, 10.0
    %s310 = scalar_select %p308, %s309, %s306
    %s311 = smul.f32 %s262, %s310
    %v312 = vstv %s311
    %313 = vst [vmem:[#allocation2] sm:$0x1] %v312
    // Predicated region
    $region10: #{tpu_custom_call.1} parent=1 // pred_check
      _
    $region11: #{tpu_custom_call.1} parent=1 // pred_check_branch
      %315 = sbr.rel (0) target = $region13
    $region12: #{tpu_custom_call.1} parent=1 // pred_region
      %s317 = ssub.s32 16, 16
      %318 = vsyncadd [#allocation3], %s317
      %s320 = sshll.u32 [#allocation2], 4
      %s321 = int_to_ptr.vmem [resolvable:$true] %s320
      %323 = dma.vmem_to_hbm [thread:$0]  %s321, 16, %s2, [#allocation3]
    $region13: #{tpu_custom_call.1} parent=1 // pred_fallthru
      _
    // Predicated region
    $region14: #{tpu_custom_call.1} parent=1 // pred_check
      _
    $region15: #{tpu_custom_call.1} parent=1 // pred_check_branch
      %325 = sbr.rel (0) target = $region17
    $region16: #{tpu_custom_call.1} parent=1 // pred_region
      %326 = dma.done [#allocation3], 16
    $region17: #{tpu_custom_call.1} parent=1 // pred_fallthru
      _
    %327 = vsyncpa [#allocation3], 1

</llo_original>
